<compile_context>
chip_gen: v5e
topology: v5e:2x2
jax: 0.10.0
libtpu: 0.0.40
codegen_flags: <defaults>
</compile_context>

<pallas_src>
import jax
import jax.numpy as jnp
from jax.experimental import pallas as pl
from jax.experimental.pallas import tpu as pltpu


def _copy_kernel(x_ref, o_ref):
    # Straight VMEM load + store of the current tile.
    o_ref[...] = x_ref[...]


def identity(x: jax.Array) -> jax.Array:
    """True PyTorch `Identity.forward` semantics: return x unchanged (no kernel)."""
    return x


def _full_array_copy(x: jax.Array) -> jax.Array:
    """Single-block copy (array small enough to live in VMEM in one shot)."""
    return pl.pallas_call(
        _copy_kernel,
        out_shape=jax.ShapeDtypeStruct(x.shape, x.dtype),
        in_specs=[pl.BlockSpec(memory_space=pltpu.VMEM)],
        out_specs=pl.BlockSpec(memory_space=pltpu.VMEM),
        # Alias output to input: no extra HBM allocation when the caller donates.
        input_output_aliases={0: 0},
    )(x)


def identity_copy(x: jax.Array, block_rows: int = 1024) -> jax.Array:
    """Materialized identity copy as a Pallas kernel (framework-plumbing path)."""
    total = x.size
    # Pick the widest lane-dense trailing dim (multiple of 128, capped at 512).
    lanes = next((l for l in (512, 256, 128) if total % l == 0), None)
    if lanes is None:
        # TODO(synk): oddly-sized arrays (size not a multiple of 128) fall back
        # to a single full-array block copy in the original layout.
        return _full_array_copy(x)

    rows = total // lanes
    x2d = x.reshape(rows, lanes)  # lane-dense 2-D slab

    if rows <= block_rows:
        # Small input: one full-array block (satisfies the (8,128) rule by
        # matching the full array extents).
        y2d = _full_array_copy(x2d)
    else:
        # Large input: 1-D grid of lane-dense tiles.  block_rows * lanes * 4 B
        # <= 2 MiB f32 per block -> double-buffered in+out <= 8 MiB, safe on
        # v5e / v6e / v7x scoped-VMEM defaults.
        block_rows = max(8, (block_rows // 8) * 8)  # keep sublane-aligned
        grid = (pl.cdiv(rows, block_rows),)
        y2d = pl.pallas_call(
            _copy_kernel,
            out_shape=jax.ShapeDtypeStruct((rows, lanes), x.dtype),
            grid=grid,
            in_specs=[pl.BlockSpec((block_rows, lanes), lambda i: (i, 0))],
            out_specs=pl.BlockSpec((block_rows, lanes), lambda i: (i, 0)),
            input_output_aliases={0: 0},
            compiler_params=pltpu.CompilerParams(
                dimension_semantics=("parallel",),  # shards across v7x's 2 TCs
            ),
        )(x2d)

    return y2d.reshape(x.shape)


if __name__ == "__main__":
    key = jax.random.PRNGKey(0)
    k1, k2 = jax.random.split(key)

    # Small NCHW input consistent with a generic forward(x).
    x = jax.random.normal(k1, (2, 4, 16, 16), dtype=jnp.float32)

    # 1) Zero-cost path (the real Identity).
    y0 = jax.block_until_ready(identity(x))
    assert y0.shape == x.shape and y0.dtype == x.dtype
    assert bool(jnp.all(y0 == x))

    # 2) Materialized Pallas copy, lane-dense single block.
    y1 = jax.block_until_ready(identity_copy(x))
    assert y1.shape == x.shape and y1.dtype == x.dtype
    assert bool(jnp.all(y1 == x))

    # 3) Materialized Pallas copy exercising the tiled grid path
    #    (4096-wide activations, small block_rows to force a multi-step grid).
    x2 = jax.random.normal(k2, (8, 4096), dtype=jnp.float32)
    y2 = jax.block_until_ready(identity_copy(x2, block_rows=16))
    assert y2.shape == x2.shape and y2.dtype == x2.dtype
    assert bool(jnp.all(y2 == x2))

    print("KERNEL_OK")
</pallas_src>

<mosaic_0001>
module attributes {stable_mosaic.version = 11 : i64} {
  func.func @_copy_kernel(%arg0: memref<4x512xf32, #tpu.memory_space<vmem>>, %arg1: memref<4x512xf32, #tpu.memory_space<vmem>>) attributes {dimension_semantics = [], scalar_prefetch = 0 : i64, scratch_operands = 0 : i64, tpu.core_type = #tpu.core_type<tc>} {
    %c0 = arith.constant 0 : index
    %c0_0 = arith.constant 0 : index
    %0 = vector.load %arg0[%c0, %c0_0] : memref<4x512xf32, #tpu.memory_space<vmem>>, vector<4x512xf32>
    %c0_1 = arith.constant 0 : index
    %c0_2 = arith.constant 0 : index
    %1 = vector.load %arg1[%c0_1, %c0_2] : memref<4x512xf32, #tpu.memory_space<vmem>>, vector<4x512xf32>
    tpu.vector_store %arg1[%c0_1, %c0_2], %0 {strides = array<i32>} : memref<4x512xf32, #tpu.memory_space<vmem>>, vector<4x512xf32>,
    return
  }
}

</mosaic_0001>

<llo_original>
// kernel: tpu_custom_call.1
$region0: #{tpu_custom_call.1}
  #allocation0 [shape = 'u32[]', space=smem, size = 0x4, offset = 0x4, fixed_abs, tag = 'smem constant byte address 0x4 - core index']
  #allocation1 [shape = 'u32[72,128]{1,0:T(1,128)}', space=vmem, size = 0x9000, scoped, tag = 'internal scratch']
  %s0 = inlined_call_operand.hbm [shape: f32[4,512], index: 0, kind: input, shape index: {}, may-alias: {0,1}]
  %s1 = inlined_call_operand.hbm [shape: f32[4,512], index: 1, kind: output, shape index: {}, may-alias: {0,1}]
  %s2 = sld [smem:[#allocation0]]
  $region18: #{tpu_custom_call.1} parent=0
    _
  %s4 = ssub.s32 1, %s2
  %s5 = scalar_select 0, %s4, %s2
  $region1: #{tpu_custom_call.1} parent=0
    #allocation2 [shape = 'u8[8192]{0}', space=vmem, size = 0x2000, scoped, tag = 'input window, operand 0, single buffered']
    #allocation3 [shape = 's32[1]{0}', space=sflag, size = 0x4, scoped, tag = 'scoped memory for tpu_custom_call.1']
    #allocation4 [shape = 's32[1]{0}', space=sflag, size = 0x4, scoped, tag = 'scoped memory for tpu_custom_call.1']
    #allocation5 [shape = 'u8[8192]{0}', space=vmem, size = 0x2000, scoped, tag = 'output window, operand 0, single buffered']
    %6 = vsyncpa [#allocation3], 0
    %7 = vsyncpa [#allocation4], 0
    // Predicated region
    $region2: #{tpu_custom_call.1} parent=1 // pred_check
      _
    $region3: #{tpu_custom_call.1} parent=1 // pred_check_branch
      %9 = sbr.rel (0) target = $region5
    $region4: #{tpu_custom_call.1} parent=1 // pred_region
      %11 = vsyncadd [#allocation3], 0
      %s13 = sshll.u32 %s0, 4
      %s14 = int_to_ptr.hbm [resolvable:$true] %s13
      %s15 = sshll.u32 [#allocation2], 4
      %s16 = int_to_ptr.vmem [resolvable:$true] %s15
      %18 = dma.hbm_to_vmem [thread:$0]  %s14, 256, %s16, [#allocation3]
    $region5: #{tpu_custom_call.1} parent=1 // pred_fallthru
      _
    // Predicated region
    $region6: #{tpu_custom_call.1} parent=1 // pred_check
      _
    $region7: #{tpu_custom_call.1} parent=1 // pred_check_branch
      %20 = sbr.rel (0) target = $region9
    $region8: #{tpu_custom_call.1} parent=1 // pred_region
      %22 = dma.done [#allocation3], 256
    $region9: #{tpu_custom_call.1} parent=1 // pred_fallthru
      _
    %v23 = vld [vmem:[#allocation2] sm:$0xff]
    %v24 = vld [vmem:[#allocation2 + $0x8] sm:$0xff]
    %25 = vst [vmem:[#allocation5] sm:$0xff] %v23
    %26 = vst [vmem:[#allocation5 + $0x8] sm:$0xff] %v24
    // Predicated region
    $region10: #{tpu_custom_call.1} parent=1 // pred_check
      _
    $region11: #{tpu_custom_call.1} parent=1 // pred_check_branch
      %28 = sbr.rel (0) target = $region13
    $region12: #{tpu_custom_call.1} parent=1 // pred_region
      %30 = vsyncadd [#allocation4], 0
      %s32 = sshll.u32 [#allocation5], 4
      %s33 = int_to_ptr.vmem [resolvable:$true] %s32
      %s34 = sshll.u32 %s1, 4
      %s35 = int_to_ptr.hbm [resolvable:$true] %s34
      %37 = dma.vmem_to_hbm [thread:$0]  %s33, 256, %s35, [#allocation4]
    $region13: #{tpu_custom_call.1} parent=1 // pred_fallthru
      _
    // Predicated region
    $region14: #{tpu_custom_call.1} parent=1 // pred_check
      _
    $region15: #{tpu_custom_call.1} parent=1 // pred_check_branch
      %39 = sbr.rel (0) target = $region17
    $region16: #{tpu_custom_call.1} parent=1 // pred_region
      %41 = dma.done [#allocation4], 256
    $region17: #{tpu_custom_call.1} parent=1 // pred_fallthru
      _
    %42 = vsyncpa [#allocation3], 1
    %43 = vsyncpa [#allocation4], 1

</llo_original>
